<compile_context>
chip_gen: v7x
topology: tpu7x:2x2x1
jax: 0.10.0
libtpu: 0.0.40
codegen_flags: <defaults>
</compile_context>

<pallas_src>
import functools

import jax
import jax.numpy as jnp
from jax.experimental import pallas as pl
from jax.experimental.pallas import tpu as pltpu

# ---- toy config (matches the module's shape relationships) --------------------------
BERT_HIDDEN = 64          # Config.bert_hidden
BLOCK_SIZE = 8            # Config.block_size  (group bilinear)
REP_HIDDEN = 32           # Config.hidden_size
B = 2                     # batch
SEQ = 16                  # document length
ENT = 6                   # entity_lim
MEN = 3                   # mention_lim
PAIRS = 8                 # pair_num


def _round_up(x, m):
    return (x + m - 1) // m * m


# ---- fused forward_test kernel -------------------------------------------------------
def _fused_kernel(wp_ref, hid_ref, tid_ref,            # scalar-prefetch refs (SMEM)
                  doc_ref, wt_ref, bc_ref,             # VMEM doc/weight, SMEM bias
                  score_ref,                           # output block [1, P]
                  ent_scr, entw_scr, head_scr, tail_scr):   # VMEM scratch
    b = pl.program_id(0)
    n_ent, n_men = wp_ref.shape[1], wp_ref.shape[2]
    n_pair = hid_ref.shape[1]
    ent_pad = ent_scr.shape[0]

    # 1) entity rep = max over mentions. Unrolled maximum chain over the M slices
    #    (M is tiny and static) -> full-width VPU ops on [1, H] rows, no axis reduce.
    #    NOTE: like the original forward_test, no mention-validity mask is applied.
    for e in range(n_ent):
        acc = doc_ref[pl.ds(wp_ref[b, e, 0], 1), :]
        for m in range(1, n_men):
            acc = jnp.maximum(acc, doc_ref[pl.ds(wp_ref[b, e, m], 1), :])
        ent_scr[pl.ds(e, 1), :] = acc
    if ent_pad != n_ent:   # static: keep the MXU input well-defined on pad rows
        ent_scr[pl.ds(n_ent, ent_pad - n_ent), :] = jnp.zeros(
            (ent_pad - n_ent, ent_scr.shape[1]), ent_scr.dtype)

    # 2) per-ENTITY folded projection (one small MXU matmul per document):
    #      entw[e, :] = ent[e, :] @ W_blockdiag
    #    so later  score[p] = <entw[head[p]], ent[tail[p]]> + b_c.
    #    Doing this on E rows instead of P rows avoids redundant MXU work (P ~ E^2).
    entw_scr[...] = jnp.dot(ent_scr[...], wt_ref[...],
                            preferred_element_type=jnp.float32)

    # 3) gather head/tail rows per pair (scalar-indexed VMEM row copies).
    #    Padded scratch rows are left uninitialized; they are sliced away in (4).
    for p in range(n_pair):
        head_scr[pl.ds(p, 1), :] = entw_scr[pl.ds(hid_ref[b, p], 1), :]
        tail_scr[pl.ds(p, 1), :] = ent_scr[pl.ds(tid_ref[b, p], 1), :]

    # 4) fused group-bilinear + Linear + linear_out: lane reduce + folded scalar bias.
    s = jnp.sum(head_scr[...] * tail_scr[...], axis=-1)
    score_ref[...] = (s[:n_pair] + bc_ref[0, 0]).reshape(1, n_pair)


# ---- wrapper: fold weights, build specs, launch --------------------------------------
@functools.partial(jax.jit, static_argnames=("block_size",))
def denoise_forward_test(embed_docu, word_pos, head_ids, tail_ids, params,
                         *, block_size=BLOCK_SIZE):
    W_bi, b_bi, w_out, b_out = params
    batch, seq_len, hidden = embed_docu.shape
    n_ent, n_men = word_pos.shape[1], word_pos.shape[2]
    n_pair = head_ids.shape[1]
    n_groups = hidden // block_size
    assert n_groups * block_size == hidden
    assert W_bi.shape[0] == hidden * block_size

    # Fold linear_out into the bilinear Linear (valid: no activation between them in
    # forward_test) and expand to a block-diagonal [H, H] weight:
    #   score[p] = sum_{g,i,j} head[p, g*bs+i] * Wc[g,i,j] * tail[p, g*bs+j] + b_c
    # so the [P, H*block_size] rel tensor is never built.
    w_c = (W_bi @ w_out).reshape(n_groups, block_size, block_size)
    eye_g = jnp.eye(n_groups, dtype=W_bi.dtype)
    w_blockdiag = jnp.einsum("gij,gh->gihj", w_c, eye_g).reshape(hidden, hidden)
    b_c = (b_bi @ w_out + b_out).reshape(1, 1).astype(jnp.float32)

    ent_pad = _round_up(max(n_ent, 1), 8)
    pair_pad = _round_up(max(n_pair, 1), 8)

    grid_spec = pltpu.PrefetchScalarGridSpec(
        num_scalar_prefetch=3,                       # word_pos, head_ids, tail_ids -> SMEM
        grid=(batch,),
        in_specs=[
            pl.BlockSpec((pl.Squeezed(), seq_len, hidden),
                         lambda b, wp, hi, ti: (b, 0, 0)),        # per-batch document tile
            pl.BlockSpec((hidden, hidden),
                         lambda b, wp, hi, ti: (0, 0)),           # folded weight, resident
            pl.BlockSpec(memory_space=pltpu.MemorySpace.SMEM),    # folded bias scalar
        ],
        out_specs=pl.BlockSpec((pl.Squeezed(), 1, n_pair),
                               lambda b, wp, hi, ti: (b, 0, 0)),
        scratch_shapes=[
            pltpu.VMEM((ent_pad, hidden), jnp.float32),   # entity reps
            pltpu.VMEM((ent_pad, hidden), jnp.float32),   # entity reps @ W_fold
            pltpu.VMEM((pair_pad, hidden), jnp.float32),  # head (projected) reps
            pltpu.VMEM((pair_pad, hidden), jnp.float32),  # tail reps
        ],
    )
    score = pl.pallas_call(
        _fused_kernel,
        out_shape=jax.ShapeDtypeStruct((batch, 1, n_pair), jnp.float32),
        grid_spec=grid_spec,
        compiler_params=pltpu.CompilerParams(dimension_semantics=("parallel",)),
    )(word_pos, head_ids, tail_ids,
      embed_docu.astype(jnp.float32), w_blockdiag.astype(jnp.float32), b_c)
    # TODO(synk): at production sizes, pad n_pair to a multiple of 128 for unmasked
    # lane-dense stores, switch the pair-gather loop to lax.fori_loop (compile time),
    # and cast MXU operands to bf16 on v6e/v7x.
    return {"score": score.reshape(batch, n_pair), "loss": 0.0}


# ---- Pure-JAX reference (original unfused math: max-pool, group bilinear, 2 Linears) --
def reference_score(embed_docu, word_pos, head_ids, tail_ids, params,
                    *, block_size=BLOCK_SIZE):
    W_bi, b_bi, w_out, b_out = params
    batch, _, hidden = embed_docu.shape
    n_pair = head_ids.shape[1]
    n_groups = hidden // block_size
    mention_rep = embed_docu[jnp.arange(batch)[:, None, None], word_pos]   # [B,E,M,H]
    entity_rep = mention_rep.max(axis=2)                                   # [B,E,H]
    head_rep = entity_rep[jnp.arange(batch)[:, None], head_ids]            # [B,P,H]
    tail_rep = entity_rep[jnp.arange(batch)[:, None], tail_ids]
    h = head_rep.reshape(batch, n_pair, n_groups, block_size)
    t = tail_rep.reshape(batch, n_pair, n_groups, block_size)
    rel = (h[..., :, None] * t[..., None, :]).reshape(batch, n_pair,
                                                      hidden * block_size)
    hid = rel @ W_bi + b_bi
    return (hid @ w_out)[..., 0] + b_out[0]


if __name__ == "__main__":
    key = jax.random.PRNGKey(0)
    ks = jax.random.split(key, 8)

    embed_docu = jax.random.normal(ks[0], (B, SEQ, BERT_HIDDEN), dtype=jnp.float32)
    word_pos = jax.random.randint(ks[1], (B, ENT, MEN), 0, SEQ, dtype=jnp.int32)
    head_ids = jax.random.randint(ks[2], (B, PAIRS), 0, ENT, dtype=jnp.int32)
    tail_ids = jax.random.randint(ks[3], (B, PAIRS), 0, ENT, dtype=jnp.int32)

    # nn.Linear-equivalent parameters, stored as [in, out]
    rel_dim = BERT_HIDDEN * BLOCK_SIZE
    W_bi = jax.random.normal(ks[4], (rel_dim, REP_HIDDEN), dtype=jnp.float32) * 0.02
    b_bi = jax.random.normal(ks[5], (REP_HIDDEN,), dtype=jnp.float32) * 0.02
    w_out = jax.random.normal(ks[6], (REP_HIDDEN, 1), dtype=jnp.float32) * 0.02
    b_out = jax.random.normal(ks[7], (1,), dtype=jnp.float32) * 0.02
    params = (W_bi, b_bi, w_out, b_out)

    out = denoise_forward_test(embed_docu, word_pos, head_ids, tail_ids, params)
    score = jax.block_until_ready(out["score"])

    ref = jax.block_until_ready(
        reference_score(embed_docu, word_pos, head_ids, tail_ids, params))

    assert score.shape == (B, PAIRS)
    assert jnp.allclose(score, ref, atol=1e-4, rtol=1e-4), "mismatch vs reference"
    print("KERNEL_OK")
</pallas_src>

<mosaic_0001>
module attributes {stable_mosaic.version = 11 : i64} {
  func.func @_fused_kernel(%arg0: i32, %arg1: memref<2x6x3xi32, #tpu.memory_space<smem>>, %arg2: memref<2x8xi32, #tpu.memory_space<smem>>, %arg3: memref<2x8xi32, #tpu.memory_space<smem>>, %arg4: memref<1x16x64xf32, #tpu.memory_space<vmem>>, %arg5: memref<64x64xf32, #tpu.memory_space<vmem>>, %arg6: memref<1x1xf32, #tpu.memory_space<smem>>, %arg7: memref<1x1x8xf32, #tpu.memory_space<vmem>>, %arg8: memref<8x64xf32, #tpu.memory_space<vmem>>, %arg9: memref<8x64xf32, #tpu.memory_space<vmem>>, %arg10: memref<8x64xf32, #tpu.memory_space<vmem>>, %arg11: memref<8x64xf32, #tpu.memory_space<vmem>>) attributes {dimension_semantics = [#tpu.dimension_semantics<parallel>], iteration_bounds = array<i64: 2>, scalar_prefetch = 3 : i64, scratch_operands = 4 : i64, tpu.core_type = #tpu.core_type<tc>, window_params = [{transform_indices = @transform_0, window_bounds = array<i64: 1, 16, 64>}, {pipeline_mode = #tpu.pipeline_mode<synchronous>, transform_indices = @transform_1, window_bounds = array<i64: 64, 64>}, {transform_indices = @transform_2, window_bounds = array<i64: 1, 1>}, {transform_indices = @transform_3, window_bounds = array<i64: 1, 1, 8>}]} {
    %0 = arith.index_cast %arg0 : i32 to index
    %c0 = arith.constant 0 : index
    %c0_0 = arith.constant 0 : index
    %1 = memref.load %arg1[%0, %c0, %c0_0] : memref<2x6x3xi32, #tpu.memory_space<smem>>
    %c0_1 = arith.constant 0 : index
    %2 = arith.index_cast %1 : i32 to index
    %c0_2 = arith.constant 0 : index
    %3 = vector.load %arg4[%c0_1, %2, %c0_2] : memref<1x16x64xf32, #tpu.memory_space<vmem>>, vector<1x1x64xf32>
    %4 = vector.shape_cast %3 : vector<1x1x64xf32> to vector<1x64xf32>
    %5 = arith.index_cast %arg0 : i32 to index
    %c0_3 = arith.constant 0 : index
    %c1 = arith.constant 1 : index
    %6 = memref.load %arg1[%5, %c0_3, %c1] : memref<2x6x3xi32, #tpu.memory_space<smem>>
    %c0_4 = arith.constant 0 : index
    %7 = arith.index_cast %6 : i32 to index
    %c0_5 = arith.constant 0 : index
    %8 = vector.load %arg4[%c0_4, %7, %c0_5] : memref<1x16x64xf32, #tpu.memory_space<vmem>>, vector<1x1x64xf32>
    %9 = vector.shape_cast %8 : vector<1x1x64xf32> to vector<1x64xf32>
    %10 = arith.maximumf %4, %9 : vector<1x64xf32>
    %11 = arith.index_cast %arg0 : i32 to index
    %c0_6 = arith.constant 0 : index
    %c2 = arith.constant 2 : index
    %12 = memref.load %arg1[%11, %c0_6, %c2] : memref<2x6x3xi32, #tpu.memory_space<smem>>
    %c0_7 = arith.constant 0 : index
    %13 = arith.index_cast %12 : i32 to index
    %c0_8 = arith.constant 0 : index
    %14 = vector.load %arg4[%c0_7, %13, %c0_8] : memref<1x16x64xf32, #tpu.memory_space<vmem>>, vector<1x1x64xf32>
    %15 = vector.shape_cast %14 : vector<1x1x64xf32> to vector<1x64xf32>
    %16 = arith.maximumf %10, %15 : vector<1x64xf32>
    %c0_9 = arith.constant 0 : index
    %c0_10 = arith.constant 0 : index
    %17 = vector.load %arg8[%c0_9, %c0_10] : memref<8x64xf32, #tpu.memory_space<vmem>>, vector<1x64xf32>
    tpu.vector_store %arg8[%c0_9, %c0_10], %16 {strides = array<i32>} : memref<8x64xf32, #tpu.memory_space<vmem>>, vector<1x64xf32>,
    %18 = arith.index_cast %arg0 : i32 to index
    %c1_11 = arith.constant 1 : index
    %c0_12 = arith.constant 0 : index
    %19 = memref.load %arg1[%18, %c1_11, %c0_12] : memref<2x6x3xi32, #tpu.memory_space<smem>>
    %c0_13 = arith.constant 0 : index
    %20 = arith.index_cast %19 : i32 to index
    %c0_14 = arith.constant 0 : index
    %21 = vector.load %arg4[%c0_13, %20, %c0_14] : memref<1x16x64xf32, #tpu.memory_space<vmem>>, vector<1x1x64xf32>
    %22 = vector.shape_cast %21 : vector<1x1x64xf32> to vector<1x64xf32>
    %23 = arith.index_cast %arg0 : i32 to index
    %c1_15 = arith.constant 1 : index
    %c1_16 = arith.constant 1 : index
    %24 = memref.load %arg1[%23, %c1_15, %c1_16] : memref<2x6x3xi32, #tpu.memory_space<smem>>
    %c0_17 = arith.constant 0 : index
    %25 = arith.index_cast %24 : i32 to index
    %c0_18 = arith.constant 0 : index
    %26 = vector.load %arg4[%c0_17, %25, %c0_18] : memref<1x16x64xf32, #tpu.memory_space<vmem>>, vector<1x1x64xf32>
    %27 = vector.shape_cast %26 : vector<1x1x64xf32> to vector<1x64xf32>
    %28 = arith.maximumf %22, %27 : vector<1x64xf32>
    %29 = arith.index_cast %arg0 : i32 to index
    %c1_19 = arith.constant 1 : index
    %c2_20 = arith.constant 2 : index
    %30 = memref.load %arg1[%29, %c1_19, %c2_20] : memref<2x6x3xi32, #tpu.memory_space<smem>>
    %c0_21 = arith.constant 0 : index
    %31 = arith.index_cast %30 : i32 to index
    %c0_22 = arith.constant 0 : index
    %32 = vector.load %arg4[%c0_21, %31, %c0_22] : memref<1x16x64xf32, #tpu.memory_space<vmem>>, vector<1x1x64xf32>
    %33 = vector.shape_cast %32 : vector<1x1x64xf32> to vector<1x64xf32>
    %34 = arith.maximumf %28, %33 : vector<1x64xf32>
    %c1_23 = arith.constant 1 : index
    %c0_24 = arith.constant 0 : index
    %35 = vector.load %arg8[%c1_23, %c0_24] : memref<8x64xf32, #tpu.memory_space<vmem>>, vector<1x64xf32>
    tpu.vector_store %arg8[%c1_23, %c0_24], %34 {strides = array<i32>} : memref<8x64xf32, #tpu.memory_space<vmem>>, vector<1x64xf32>,
    %36 = arith.index_cast %arg0 : i32 to index
    %c2_25 = arith.constant 2 : index
    %c0_26 = arith.constant 0 : index
    %37 = memref.load %arg1[%36, %c2_25, %c0_26] : memref<2x6x3xi32, #tpu.memory_space<smem>>
    %c0_27 = arith.constant 0 : index
    %38 = arith.index_cast %37 : i32 to index
    %c0_28 = arith.constant 0 : index
    %39 = vector.load %arg4[%c0_27, %38, %c0_28] : memref<1x16x64xf32, #tpu.memory_space<vmem>>, vector<1x1x64xf32>
    %40 = vector.shape_cast %39 : vector<1x1x64xf32> to vector<1x64xf32>
    %41 = arith.index_cast %arg0 : i32 to index
    %c2_29 = arith.constant 2 : index
    %c1_30 = arith.constant 1 : index
    %42 = memref.load %arg1[%41, %c2_29, %c1_30] : memref<2x6x3xi32, #tpu.memory_space<smem>>
    %c0_31 = arith.constant 0 : index
    %43 = arith.index_cast %42 : i32 to index
    %c0_32 = arith.constant 0 : index
    %44 = vector.load %arg4[%c0_31, %43, %c0_32] : memref<1x16x64xf32, #tpu.memory_space<vmem>>, vector<1x1x64xf32>
    %45 = vector.shape_cast %44 : vector<1x1x64xf32> to vector<1x64xf32>
    %46 = arith.maximumf %40, %45 : vector<1x64xf32>
    %47 = arith.index_cast %arg0 : i32 to index
    %c2_33 = arith.constant 2 : index
    %c2_34 = arith.constant 2 : index
    %48 = memref.load %arg1[%47, %c2_33, %c2_34] : memref<2x6x3xi32, #tpu.memory_space<smem>>
    %c0_35 = arith.constant 0 : index
    %49 = arith.index_cast %48 : i32 to index
    %c0_36 = arith.constant 0 : index
    %50 = vector.load %arg4[%c0_35, %49, %c0_36] : memref<1x16x64xf32, #tpu.memory_space<vmem>>, vector<1x1x64xf32>
    %51 = vector.shape_cast %50 : vector<1x1x64xf32> to vector<1x64xf32>
    %52 = arith.maximumf %46, %51 : vector<1x64xf32>
    %c2_37 = arith.constant 2 : index
    %c0_38 = arith.constant 0 : index
    %53 = vector.load %arg8[%c2_37, %c0_38] : memref<8x64xf32, #tpu.memory_space<vmem>>, vector<1x64xf32>
    tpu.vector_store %arg8[%c2_37, %c0_38], %52 {strides = array<i32>} : memref<8x64xf32, #tpu.memory_space<vmem>>, vector<1x64xf32>,
    %54 = arith.index_cast %arg0 : i32 to index
    %c3 = arith.constant 3 : index
    %c0_39 = arith.constant 0 : index
    %55 = memref.load %arg1[%54, %c3, %c0_39] : memref<2x6x3xi32, #tpu.memory_space<smem>>
    %c0_40 = arith.constant 0 : index
    %56 = arith.index_cast %55 : i32 to index
    %c0_41 = arith.constant 0 : index
    %57 = vector.load %arg4[%c0_40, %56, %c0_41] : memref<1x16x64xf32, #tpu.memory_space<vmem>>, vector<1x1x64xf32>
    %58 = vector.shape_cast %57 : vector<1x1x64xf32> to vector<1x64xf32>
    %59 = arith.index_cast %arg0 : i32 to index
    %c3_42 = arith.constant 3 : index
    %c1_43 = arith.constant 1 : index
    %60 = memref.load %arg1[%59, %c3_42, %c1_43] : memref<2x6x3xi32, #tpu.memory_space<smem>>
    %c0_44 = arith.constant 0 : index
    %61 = arith.index_cast %60 : i32 to index
    %c0_45 = arith.constant 0 : index
    %62 = vector.load %arg4[%c0_44, %61, %c0_45] : memref<1x16x64xf32, #tpu.memory_space<vmem>>, vector<1x1x64xf32>
    %63 = vector.shape_cast %62 : vector<1x1x64xf32> to vector<1x64xf32>
    %64 = arith.maximumf %58, %63 : vector<1x64xf32>
    %65 = arith.index_cast %arg0 : i32 to index
    %c3_46 = arith.constant 3 : index
    %c2_47 = arith.constant 2 : index
    %66 = memref.load %arg1[%65, %c3_46, %c2_47] : memref<2x6x3xi32, #tpu.memory_space<smem>>
    %c0_48 = arith.constant 0 : index
    %67 = arith.index_cast %66 : i32 to index
    %c0_49 = arith.constant 0 : index
    %68 = vector.load %arg4[%c0_48, %67, %c0_49] : memref<1x16x64xf32, #tpu.memory_space<vmem>>, vector<1x1x64xf32>
    %69 = vector.shape_cast %68 : vector<1x1x64xf32> to vector<1x64xf32>
    %70 = arith.maximumf %64, %69 : vector<1x64xf32>
    %c3_50 = arith.constant 3 : index
    %c0_51 = arith.constant 0 : index
    %71 = vector.load %arg8[%c3_50, %c0_51] : memref<8x64xf32, #tpu.memory_space<vmem>>, vector<1x64xf32>
    tpu.vector_store %arg8[%c3_50, %c0_51], %70 {strides = array<i32>} : memref<8x64xf32, #tpu.memory_space<vmem>>, vector<1x64xf32>,
    %72 = arith.index_cast %arg0 : i32 to index
    %c4 = arith.constant 4 : index
    %c0_52 = arith.constant 0 : index
    %73 = memref.load %arg1[%72, %c4, %c0_52] : memref<2x6x3xi32, #tpu.memory_space<smem>>
    %c0_53 = arith.constant 0 : index
    %74 = arith.index_cast %73 : i32 to index
    %c0_54 = arith.constant 0 : index
    %75 = vector.load %arg4[%c0_53, %74, %c0_54] : memref<1x16x64xf32, #tpu.memory_space<vmem>>, vector<1x1x64xf32>
    %76 = vector.shape_cast %75 : vector<1x1x64xf32> to vector<1x64xf32>
    %77 = arith.index_cast %arg0 : i32 to index
    %c4_55 = arith.constant 4 : index
    %c1_56 = arith.constant 1 : index
    %78 = memref.load %arg1[%77, %c4_55, %c1_56] : memref<2x6x3xi32, #tpu.memory_space<smem>>
    %c0_57 = arith.constant 0 : index
    %79 = arith.index_cast %78 : i32 to index
    %c0_58 = arith.constant 0 : index
    %80 = vector.load %arg4[%c0_57, %79, %c0_58] : memref<1x16x64xf32, #tpu.memory_space<vmem>>, vector<1x1x64xf32>
    %81 = vector.shape_cast %80 : vector<1x1x64xf32> to vector<1x64xf32>
    %82 = arith.maximumf %76, %81 : vector<1x64xf32>
    %83 = arith.index_cast %arg0 : i32 to index
    %c4_59 = arith.constant 4 : index
    %c2_60 = arith.constant 2 : index
    %84 = memref.load %arg1[%83, %c4_59, %c2_60] : memref<2x6x3xi32, #tpu.memory_space<smem>>
    %c0_61 = arith.constant 0 : index
    %85 = arith.index_cast %84 : i32 to index
    %c0_62 = arith.constant 0 : index
    %86 = vector.load %arg4[%c0_61, %85, %c0_62] : memref<1x16x64xf32, #tpu.memory_space<vmem>>, vector<1x1x64xf32>
    %87 = vector.shape_cast %86 : vector<1x1x64xf32> to vector<1x64xf32>
    %88 = arith.maximumf %82, %87 : vector<1x64xf32>
    %c4_63 = arith.constant 4 : index
    %c0_64 = arith.constant 0 : index
    %89 = vector.load %arg8[%c4_63, %c0_64] : memref<8x64xf32, #tpu.memory_space<vmem>>, vector<1x64xf32>
    tpu.vector_store %arg8[%c4_63, %c0_64], %88 {strides = array<i32>} : memref<8x64xf32, #tpu.memory_space<vmem>>, vector<1x64xf32>,
    %90 = arith.index_cast %arg0 : i32 to index
    %c5 = arith.constant 5 : index
    %c0_65 = arith.constant 0 : index
    %91 = memref.load %arg1[%90, %c5, %c0_65] : memref<2x6x3xi32, #tpu.memory_space<smem>>
    %c0_66 = arith.constant 0 : index
    %92 = arith.index_cast %91 : i32 to index
    %c0_67 = arith.constant 0 : index
    %93 = vector.load %arg4[%c0_66, %92, %c0_67] : memref<1x16x64xf32, #tpu.memory_space<vmem>>, vector<1x1x64xf32>
    %94 = vector.shape_cast %93 : vector<1x1x64xf32> to vector<1x64xf32>
    %95 = arith.index_cast %arg0 : i32 to index
    %c5_68 = arith.constant 5 : index
    %c1_69 = arith.constant 1 : index
    %96 = memref.load %arg1[%95, %c5_68, %c1_69] : memref<2x6x3xi32, #tpu.memory_space<smem>>
    %c0_70 = arith.constant 0 : index
    %97 = arith.index_cast %96 : i32 to index
    %c0_71 = arith.constant 0 : index
    %98 = vector.load %arg4[%c0_70, %97, %c0_71] : memref<1x16x64xf32, #tpu.memory_space<vmem>>, vector<1x1x64xf32>
    %99 = vector.shape_cast %98 : vector<1x1x64xf32> to vector<1x64xf32>
    %100 = arith.maximumf %94, %99 : vector<1x64xf32>
    %101 = arith.index_cast %arg0 : i32 to index
    %c5_72 = arith.constant 5 : index
    %c2_73 = arith.constant 2 : index
    %102 = memref.load %arg1[%101, %c5_72, %c2_73] : memref<2x6x3xi32, #tpu.memory_space<smem>>
    %c0_74 = arith.constant 0 : index
    %103 = arith.index_cast %102 : i32 to index
    %c0_75 = arith.constant 0 : index
    %104 = vector.load %arg4[%c0_74, %103, %c0_75] : memref<1x16x64xf32, #tpu.memory_space<vmem>>, vector<1x1x64xf32>
    %105 = vector.shape_cast %104 : vector<1x1x64xf32> to vector<1x64xf32>
    %106 = arith.maximumf %100, %105 : vector<1x64xf32>
    %c5_76 = arith.constant 5 : index
    %c0_77 = arith.constant 0 : index
    %107 = vector.load %arg8[%c5_76, %c0_77] : memref<8x64xf32, #tpu.memory_space<vmem>>, vector<1x64xf32>
    tpu.vector_store %arg8[%c5_76, %c0_77], %106 {strides = array<i32>} : memref<8x64xf32, #tpu.memory_space<vmem>>, vector<1x64xf32>,
    %cst = arith.constant 0.000000e+00 : f32
    %108 = vector.broadcast %cst : f32 to vector<2x64xf32>
    %c6 = arith.constant 6 : index
    %c0_78 = arith.constant 0 : index
    %109 = vector.load %arg8[%c6, %c0_78] : memref<8x64xf32, #tpu.memory_space<vmem>>, vector<2x64xf32>
    tpu.vector_store %arg8[%c6, %c0_78], %108 {strides = array<i32>} : memref<8x64xf32, #tpu.memory_space<vmem>>, vector<2x64xf32>,
    %c0_79 = arith.constant 0 : index
    %c0_80 = arith.constant 0 : index
    %110 = vector.load %arg8[%c0_79, %c0_80] : memref<8x64xf32, #tpu.memory_space<vmem>>, vector<8x64xf32>
    %c0_81 = arith.constant 0 : index
    %c0_82 = arith.constant 0 : index
    %111 = vector.load %arg5[%c0_81, %c0_82] : memref<64x64xf32, #tpu.memory_space<vmem>>, vector<64x64xf32>
    %cst_83 = arith.constant dense<0.000000e+00> : vector<8x64xf32>
    %112 = tpu.matmul %110, %111, %cst_83 {dimension_numbers = #tpu.dot_dimension_numbers<[1], [0], [0], [1], [0, 0, 1, 1], [], []>} : vector<8x64xf32>, vector<64x64xf32>, vector<8x64xf32> -> vector<8x64xf32>
    %c0_84 = arith.constant 0 : index
    %c0_85 = arith.constant 0 : index
    %113 = vector.load %arg9[%c0_84, %c0_85] : memref<8x64xf32, #tpu.memory_space<vmem>>, vector<8x64xf32>
    tpu.vector_store %arg9[%c0_84, %c0_85], %112 {strides = array<i32>} : memref<8x64xf32, #tpu.memory_space<vmem>>, vector<8x64xf32>,
    %114 = arith.index_cast %arg0 : i32 to index
    %c0_86 = arith.constant 0 : index
    %115 = memref.load %arg2[%114, %c0_86] : memref<2x8xi32, #tpu.memory_space<smem>>
    %116 = arith.index_cast %115 : i32 to index
    %c0_87 = arith.constant 0 : index
    %117 = vector.load %arg9[%116, %c0_87] : memref<8x64xf32, #tpu.memory_space<vmem>>, vector<1x64xf32>
    %c0_88 = arith.constant 0 : index
    %c0_89 = arith.constant 0 : index
    %118 = vector.load %arg10[%c0_88, %c0_89] : memref<8x64xf32, #tpu.memory_space<vmem>>, vector<1x64xf32>
    tpu.vector_store %arg10[%c0_88, %c0_89], %117 {strides = array<i32>} : memref<8x64xf32, #tpu.memory_space<vmem>>, vector<1x64xf32>,
    %119 = arith.index_cast %arg0 : i32 to index
    %c0_90 = arith.constant 0 : index
    %120 = memref.load %arg3[%119, %c0_90] : memref<2x8xi32, #tpu.memory_space<smem>>
    %121 = arith.index_cast %120 : i32 to index
    %c0_91 = arith.constant 0 : index
    %122 = vector.load %arg8[%121, %c0_91] : memref<8x64xf32, #tpu.memory_space<vmem>>, vector<1x64xf32>
    %c0_92 = arith.constant 0 : index
    %c0_93 = arith.constant 0 : index
    %123 = vector.load %arg11[%c0_92, %c0_93] : memref<8x64xf32, #tpu.memory_space<vmem>>, vector<1x64xf32>
    tpu.vector_store %arg11[%c0_92, %c0_93], %122 {strides = array<i32>} : memref<8x64xf32, #tpu.memory_space<vmem>>, vector<1x64xf32>,
    %124 = arith.index_cast %arg0 : i32 to index
    %c1_94 = arith.constant 1 : index
    %125 = memref.load %arg2[%124, %c1_94] : memref<2x8xi32, #tpu.memory_space<smem>>
    %126 = arith.index_cast %125 : i32 to index
    %c0_95 = arith.constant 0 : index
    %127 = vector.load %arg9[%126, %c0_95] : memref<8x64xf32, #tpu.memory_space<vmem>>, vector<1x64xf32>
    %c1_96 = arith.constant 1 : index
    %c0_97 = arith.constant 0 : index
    %128 = vector.load %arg10[%c1_96, %c0_97] : memref<8x64xf32, #tpu.memory_space<vmem>>, vector<1x64xf32>
    tpu.vector_store %arg10[%c1_96, %c0_97], %127 {strides = array<i32>} : memref<8x64xf32, #tpu.memory_space<vmem>>, vector<1x64xf32>,
    %129 = arith.index_cast %arg0 : i32 to index
    %c1_98 = arith.constant 1 : index
    %130 = memref.load %arg3[%129, %c1_98] : memref<2x8xi32, #tpu.memory_space<smem>>
    %131 = arith.index_cast %130 : i32 to index
    %c0_99 = arith.constant 0 : index
    %132 = vector.load %arg8[%131, %c0_99] : memref<8x64xf32, #tpu.memory_space<vmem>>, vector<1x64xf32>
    %c1_100 = arith.constant 1 : index
    %c0_101 = arith.constant 0 : index
    %133 = vector.load %arg11[%c1_100, %c0_101] : memref<8x64xf32, #tpu.memory_space<vmem>>, vector<1x64xf32>
    tpu.vector_store %arg11[%c1_100, %c0_101], %132 {strides = array<i32>} : memref<8x64xf32, #tpu.memory_space<vmem>>, vector<1x64xf32>,
    %134 = arith.index_cast %arg0 : i32 to index
    %c2_102 = arith.constant 2 : index
    %135 = memref.load %arg2[%134, %c2_102] : memref<2x8xi32, #tpu.memory_space<smem>>
    %136 = arith.index_cast %135 : i32 to index
    %c0_103 = arith.constant 0 : index
    %137 = vector.load %arg9[%136, %c0_103] : memref<8x64xf32, #tpu.memory_space<vmem>>, vector<1x64xf32>
    %c2_104 = arith.constant 2 : index
    %c0_105 = arith.constant 0 : index
    %138 = vector.load %arg10[%c2_104, %c0_105] : memref<8x64xf32, #tpu.memory_space<vmem>>, vector<1x64xf32>
    tpu.vector_store %arg10[%c2_104, %c0_105], %137 {strides = array<i32>} : memref<8x64xf32, #tpu.memory_space<vmem>>, vector<1x64xf32>,
    %139 = arith.index_cast %arg0 : i32 to index
    %c2_106 = arith.constant 2 : index
    %140 = memref.load %arg3[%139, %c2_106] : memref<2x8xi32, #tpu.memory_space<smem>>
    %141 = arith.index_cast %140 : i32 to index
    %c0_107 = arith.constant 0 : index
    %142 = vector.load %arg8[%141, %c0_107] : memref<8x64xf32, #tpu.memory_space<vmem>>, vector<1x64xf32>
    %c2_108 = arith.constant 2 : index
    %c0_109 = arith.constant 0 : index
    %143 = vector.load %arg11[%c2_108, %c0_109] : memref<8x64xf32, #tpu.memory_space<vmem>>, vector<1x64xf32>
    tpu.vector_store %arg11[%c2_108, %c0_109], %142 {strides = array<i32>} : memref<8x64xf32, #tpu.memory_space<vmem>>, vector<1x64xf32>,
    %144 = arith.index_cast %arg0 : i32 to index
    %c3_110 = arith.constant 3 : index
    %145 = memref.load %arg2[%144, %c3_110] : memref<2x8xi32, #tpu.memory_space<smem>>
    %146 = arith.index_cast %145 : i32 to index
    %c0_111 = arith.constant 0 : index
    %147 = vector.load %arg9[%146, %c0_111] : memref<8x64xf32, #tpu.memory_space<vmem>>, vector<1x64xf32>
    %c3_112 = arith.constant 3 : index
    %c0_113 = arith.constant 0 : index
    %148 = vector.load %arg10[%c3_112, %c0_113] : memref<8x64xf32, #tpu.memory_space<vmem>>, vector<1x64xf32>
    tpu.vector_store %arg10[%c3_112, %c0_113], %147 {strides = array<i32>} : memref<8x64xf32, #tpu.memory_space<vmem>>, vector<1x64xf32>,
    %149 = arith.index_cast %arg0 : i32 to index
    %c3_114 = arith.constant 3 : index
    %150 = memref.load %arg3[%149, %c3_114] : memref<2x8xi32, #tpu.memory_space<smem>>
    %151 = arith.index_cast %150 : i32 to index
    %c0_115 = arith.constant 0 : index
    %152 = vector.load %arg8[%151, %c0_115] : memref<8x64xf32, #tpu.memory_space<vmem>>, vector<1x64xf32>
    %c3_116 = arith.constant 3 : index
    %c0_117 = arith.constant 0 : index
    %153 = vector.load %arg11[%c3_116, %c0_117] : memref<8x64xf32, #tpu.memory_space<vmem>>, vector<1x64xf32>
    tpu.vector_store %arg11[%c3_116, %c0_117], %152 {strides = array<i32>} : memref<8x64xf32, #tpu.memory_space<vmem>>, vector<1x64xf32>,
    %154 = arith.index_cast %arg0 : i32 to index
    %c4_118 = arith.constant 4 : index
    %155 = memref.load %arg2[%154, %c4_118] : memref<2x8xi32, #tpu.memory_space<smem>>
    %156 = arith.index_cast %155 : i32 to index
    %c0_119 = arith.constant 0 : index
    %157 = vector.load %arg9[%156, %c0_119] : memref<8x64xf32, #tpu.memory_space<vmem>>, vector<1x64xf32>
    %c4_120 = arith.constant 4 : index
    %c0_121 = arith.constant 0 : index
    %158 = vector.load %arg10[%c4_120, %c0_121] : memref<8x64xf32, #tpu.memory_space<vmem>>, vector<1x64xf32>
    tpu.vector_store %arg10[%c4_120, %c0_121], %157 {strides = array<i32>} : memref<8x64xf32, #tpu.memory_space<vmem>>, vector<1x64xf32>,
    %159 = arith.index_cast %arg0 : i32 to index
    %c4_122 = arith.constant 4 : index
    %160 = memref.load %arg3[%159, %c4_122] : memref<2x8xi32, #tpu.memory_space<smem>>
    %161 = arith.index_cast %160 : i32 to index
    %c0_123 = arith.constant 0 : index
    %162 = vector.load %arg8[%161, %c0_123] : memref<8x64xf32, #tpu.memory_space<vmem>>, vector<1x64xf32>
    %c4_124 = arith.constant 4 : index
    %c0_125 = arith.constant 0 : index
    %163 = vector.load %arg11[%c4_124, %c0_125] : memref<8x64xf32, #tpu.memory_space<vmem>>, vector<1x64xf32>
    tpu.vector_store %arg11[%c4_124, %c0_125], %162 {strides = array<i32>} : memref<8x64xf32, #tpu.memory_space<vmem>>, vector<1x64xf32>,
    %164 = arith.index_cast %arg0 : i32 to index
    %c5_126 = arith.constant 5 : index
    %165 = memref.load %arg2[%164, %c5_126] : memref<2x8xi32, #tpu.memory_space<smem>>
    %166 = arith.index_cast %165 : i32 to index
    %c0_127 = arith.constant 0 : index
    %167 = vector.load %arg9[%166, %c0_127] : memref<8x64xf32, #tpu.memory_space<vmem>>, vector<1x64xf32>
    %c5_128 = arith.constant 5 : index
    %c0_129 = arith.constant 0 : index
    %168 = vector.load %arg10[%c5_128, %c0_129] : memref<8x64xf32, #tpu.memory_space<vmem>>, vector<1x64xf32>
    tpu.vector_store %arg10[%c5_128, %c0_129], %167 {strides = array<i32>} : memref<8x64xf32, #tpu.memory_space<vmem>>, vector<1x64xf32>,
    %169 = arith.index_cast %arg0 : i32 to index
    %c5_130 = arith.constant 5 : index
    %170 = memref.load %arg3[%169, %c5_130] : memref<2x8xi32, #tpu.memory_space<smem>>
    %171 = arith.index_cast %170 : i32 to index
    %c0_131 = arith.constant 0 : index
    %172 = vector.load %arg8[%171, %c0_131] : memref<8x64xf32, #tpu.memory_space<vmem>>, vector<1x64xf32>
    %c5_132 = arith.constant 5 : index
    %c0_133 = arith.constant 0 : index
    %173 = vector.load %arg11[%c5_132, %c0_133] : memref<8x64xf32, #tpu.memory_space<vmem>>, vector<1x64xf32>
    tpu.vector_store %arg11[%c5_132, %c0_133], %172 {strides = array<i32>} : memref<8x64xf32, #tpu.memory_space<vmem>>, vector<1x64xf32>,
    %174 = arith.index_cast %arg0 : i32 to index
    %c6_134 = arith.constant 6 : index
    %175 = memref.load %arg2[%174, %c6_134] : memref<2x8xi32, #tpu.memory_space<smem>>
    %176 = arith.index_cast %175 : i32 to index
    %c0_135 = arith.constant 0 : index
    %177 = vector.load %arg9[%176, %c0_135] : memref<8x64xf32, #tpu.memory_space<vmem>>, vector<1x64xf32>
    %c6_136 = arith.constant 6 : index
    %c0_137 = arith.constant 0 : index
    %178 = vector.load %arg10[%c6_136, %c0_137] : memref<8x64xf32, #tpu.memory_space<vmem>>, vector<1x64xf32>
    tpu.vector_store %arg10[%c6_136, %c0_137], %177 {strides = array<i32>} : memref<8x64xf32, #tpu.memory_space<vmem>>, vector<1x64xf32>,
    %179 = arith.index_cast %arg0 : i32 to index
    %c6_138 = arith.constant 6 : index
    %180 = memref.load %arg3[%179, %c6_138] : memref<2x8xi32, #tpu.memory_space<smem>>
    %181 = arith.index_cast %180 : i32 to index
    %c0_139 = arith.constant 0 : index
    %182 = vector.load %arg8[%181, %c0_139] : memref<8x64xf32, #tpu.memory_space<vmem>>, vector<1x64xf32>
    %c6_140 = arith.constant 6 : index
    %c0_141 = arith.constant 0 : index
    %183 = vector.load %arg11[%c6_140, %c0_141] : memref<8x64xf32, #tpu.memory_space<vmem>>, vector<1x64xf32>
    tpu.vector_store %arg11[%c6_140, %c0_141], %182 {strides = array<i32>} : memref<8x64xf32, #tpu.memory_space<vmem>>, vector<1x64xf32>,
    %184 = arith.index_cast %arg0 : i32 to index
    %c7 = arith.constant 7 : index
    %185 = memref.load %arg2[%184, %c7] : memref<2x8xi32, #tpu.memory_space<smem>>
    %186 = arith.index_cast %185 : i32 to index
    %c0_142 = arith.constant 0 : index
    %187 = vector.load %arg9[%186, %c0_142] : memref<8x64xf32, #tpu.memory_space<vmem>>, vector<1x64xf32>
    %c7_143 = arith.constant 7 : index
    %c0_144 = arith.constant 0 : index
    %188 = vector.load %arg10[%c7_143, %c0_144] : memref<8x64xf32, #tpu.memory_space<vmem>>, vector<1x64xf32>
    tpu.vector_store %arg10[%c7_143, %c0_144], %187 {strides = array<i32>} : memref<8x64xf32, #tpu.memory_space<vmem>>, vector<1x64xf32>,
    %189 = arith.index_cast %arg0 : i32 to index
    %c7_145 = arith.constant 7 : index
    %190 = memref.load %arg3[%189, %c7_145] : memref<2x8xi32, #tpu.memory_space<smem>>
    %191 = arith.index_cast %190 : i32 to index
    %c0_146 = arith.constant 0 : index
    %192 = vector.load %arg8[%191, %c0_146] : memref<8x64xf32, #tpu.memory_space<vmem>>, vector<1x64xf32>
    %c7_147 = arith.constant 7 : index
    %c0_148 = arith.constant 0 : index
    %193 = vector.load %arg11[%c7_147, %c0_148] : memref<8x64xf32, #tpu.memory_space<vmem>>, vector<1x64xf32>
    tpu.vector_store %arg11[%c7_147, %c0_148], %192 {strides = array<i32>} : memref<8x64xf32, #tpu.memory_space<vmem>>, vector<1x64xf32>,
    %c0_149 = arith.constant 0 : index
    %c0_150 = arith.constant 0 : index
    %194 = vector.load %arg10[%c0_149, %c0_150] : memref<8x64xf32, #tpu.memory_space<vmem>>, vector<8x64xf32>
    %c0_151 = arith.constant 0 : index
    %c0_152 = arith.constant 0 : index
    %195 = vector.load %arg11[%c0_151, %c0_152] : memref<8x64xf32, #tpu.memory_space<vmem>>, vector<8x64xf32>
    %196 = arith.mulf %194, %195 : vector<8x64xf32>
    %cst_153 = arith.constant dense<0.000000e+00> : vector<8xf32>
    %197 = vector.multi_reduction <add>, %196, %cst_153 [1] : vector<8x64xf32> to vector<8xf32>
    %c0_154 = arith.constant 0 : index
    %c0_155 = arith.constant 0 : index
    %198 = memref.load %arg6[%c0_154, %c0_155] : memref<1x1xf32, #tpu.memory_space<smem>>
    %199 = vector.broadcast %198 : f32 to vector<8xf32>
    %200 = arith.addf %197, %199 : vector<8xf32>
    %201 = vector.shape_cast %200 : vector<8xf32> to vector<1x8xf32>
    %c0_156 = arith.constant 0 : index
    %c0_157 = arith.constant 0 : index
    %c0_158 = arith.constant 0 : index
    %202 = vector.load %arg7[%c0_156, %c0_157, %c0_158] : memref<1x1x8xf32, #tpu.memory_space<vmem>>, vector<1x1x8xf32>
    %203 = vector.shape_cast %202 : vector<1x1x8xf32> to vector<1x8xf32>
    %204 = vector.shape_cast %201 : vector<1x8xf32> to vector<1x1x8xf32>
    tpu.vector_store %arg7[%c0_156, %c0_157, %c0_158], %204 {strides = array<i32>} : memref<1x1x8xf32, #tpu.memory_space<vmem>>, vector<1x1x8xf32>,
    return
  }
  func.func @transform_0(%arg0: i32, %arg1: memref<2x6x3xi32, #tpu.memory_space<smem>>, %arg2: memref<2x8xi32, #tpu.memory_space<smem>>, %arg3: memref<2x8xi32, #tpu.memory_space<smem>>) -> (i32, i32, i32) {
    %c0_i32 = arith.constant 0 : i32
    %c0_i32_0 = arith.constant 0 : i32
    %c0_i32_1 = arith.constant 0 : i32
    return %arg0, %c0_i32, %c0_i32_0 : i32, i32, i32
  }
  func.func @transform_1(%arg0: i32, %arg1: memref<2x6x3xi32, #tpu.memory_space<smem>>, %arg2: memref<2x8xi32, #tpu.memory_space<smem>>, %arg3: memref<2x8xi32, #tpu.memory_space<smem>>) -> (i32, i32) {
    %c0_i32 = arith.constant 0 : i32
    %c0_i32_0 = arith.constant 0 : i32
    %c0_i32_1 = arith.constant 0 : i32
    return %c0_i32, %c0_i32_0 : i32, i32
  }
  func.func @transform_2(%arg0: i32, %arg1: memref<2x6x3xi32, #tpu.memory_space<smem>>, %arg2: memref<2x8xi32, #tpu.memory_space<smem>>, %arg3: memref<2x8xi32, #tpu.memory_space<smem>>) -> (i32, i32) {
    %c0_i32 = arith.constant 0 : i32
    %c0_i32_0 = arith.constant 0 : i32
    %c0_i32_1 = arith.constant 0 : i32
    return %c0_i32, %c0_i32_0 : i32, i32
  }
  func.func @transform_3(%arg0: i32, %arg1: memref<2x6x3xi32, #tpu.memory_space<smem>>, %arg2: memref<2x8xi32, #tpu.memory_space<smem>>, %arg3: memref<2x8xi32, #tpu.memory_space<smem>>) -> (i32, i32, i32) {
    %c0_i32 = arith.constant 0 : i32
    %c0_i32_0 = arith.constant 0 : i32
    %c0_i32_1 = arith.constant 0 : i32
    return %arg0, %c0_i32, %c0_i32_0 : i32, i32, i32
  }
}

</mosaic_0001>

<llo_original>
// kernel: denoise_forward_test.1
$region0: #{denoise_forward_test.1}
  #allocation0 [shape = 'u32[]', space=smem, size = 0x4, offset = 0x4, fixed_abs, tag = 'smem constant byte address 0x4 - core index']
  #allocation1 [shape = 'u32[144,128]{1,0:T(1,128)}', space=vmem, size = 0x12000, scoped, tag = 'internal scratch']
  #allocation2 [shape = 'f32[8,64]{1,0:T(8,128)}', space=vmem, size = 0x1000, scoped, tag = 'scratch operand']
  #allocation3 [shape = 'f32[8,64]{1,0:T(8,128)}', space=vmem, size = 0x1000, scoped, tag = 'scratch operand']
  #allocation4 [shape = 'f32[8,64]{1,0:T(8,128)}', space=vmem, size = 0x1000, scoped, tag = 'scratch operand']
  #allocation5 [shape = 'f32[8,64]{1,0:T(8,128)}', space=vmem, size = 0x1000, scoped, tag = 'scratch operand']
  #allocation6 [shape = 's32[1]{0}', space=sflag, size = 0x4, scoped, tag = 'scoped memory for denoise_forward_test.1']
  #allocation7 [shape = 'u8[8192]{0}', space=smem, size = 0x2000, scoped, tag = 'prefetched SMEM operand 0']
  #allocation8 [shape = 'u8[1024]{0}', space=smem, size = 0x400, scoped, tag = 'prefetched SMEM operand 1']
  #allocation9 [shape = 'u8[1024]{0}', space=smem, size = 0x400, scoped, tag = 'prefetched SMEM operand 2']
  #allocation10 [shape = 'f32[1,1]{1,0:T(1,128)S(6)}', space=smem, size = 0x200, scoped, tag = 'scoped memory for denoise_forward_test.1']
  %s0 = inlined_call_operand.vmem [shape: s32[2,6,3], index: 0, kind: input, shape index: {}]
  %s1 = inlined_call_operand.vmem [shape: s32[2,8], index: 1, kind: input, shape index: {}]
  %s2 = inlined_call_operand.vmem [shape: s32[2,8], index: 2, kind: input, shape index: {}]
  %s3 = inlined_call_operand.vmem [shape: f32[2,16,64], index: 3, kind: input, shape index: {}]
  %s4 = inlined_call_operand.vmem [shape: f32[64,64], index: 4, kind: input, shape index: {}]
  %s5 = inlined_call_operand.<no memory space> [shape: f32[1,1], index: 5, kind: input, shape index: {}]
  %s6 = inlined_call_operand.hbm [shape: f32[2,1,8], index: 6, kind: output, shape index: {}]
  %s7 = sld [smem:[#allocation0]]
  $region45: #{denoise_forward_test.1} parent=0
    _
  %s9 = ssub.s32 1, %s7
  %s10 = scalar_select 0, %s9, %s7
  %s11 = sshll.u32 %s0, 4
  %s12 = int_to_ptr.vmem [resolvable:$true] %s11
  %14 = dma.vmem_to_smem %s12, 256, [#allocation7], [#allocation6]
  %s15 = sshll.u32 %s1, 4
  %s16 = int_to_ptr.vmem [resolvable:$true] %s15
  %18 = dma.vmem_to_smem %s16, 32, [#allocation8], [#allocation6]
  %s19 = sshll.u32 %s2, 4
  %s20 = int_to_ptr.vmem [resolvable:$true] %s19
  %22 = dma.vmem_to_smem %s20, 32, [#allocation9], [#allocation6]
  %23 = sst [smem:[#allocation10]] %s5
  %24 = dma.done [#allocation6], 320
  %25 = sfence
  $region1: #{denoise_forward_test.1} parent=0
    #allocation11 [shape = 'u8[1024]{0}', space=vmem, size = 0x400, scoped, tag = 'output window, operand 0']
    #allocation12 [shape = 's32[2]{0}', space=sflag, size = 0x8, scoped, tag = 'scoped memory for denoise_forward_test.1']
    %26 = vsyncpa [#allocation12], 0
    %s27 = scalar_lea.sflag [#allocation12], 1
    %28 = vsyncpa %s27, 0
    loop: start=0, step=1, limit=4
    $region2: #{denoise_forward_test.1} parent=1 // loop_pre_header
      _
    $region3: #{denoise_forward_test.1} parent=1 // loop_header
      %s30 = sphi 0, %s34
      %p31 = scmp.ge.s32.totalorder %s30, 4
      %s40 = sphi 0, %s42
      %s43 = sphi 0, %s40
      %s44 = sphi 0, %s43
      %s60 = sphi 0, %s44
      %s64 = sphi 0, %s64
      %s66 = sphi 0, %s64
      %s67 = sphi 0, %s66
      %s81 = sphi 0, %s67
      %s85 = sphi 0, %s85
      %s87 = sphi 0, %s85
      %s88 = sphi 0, %s87
      %s102 = sphi 0, %s88
      %s108 = sphi 0, %s110
      %s111 = sphi 0, %s108
      %s112 = sphi 0, %s111
      %s128 = sphi 0, %s112
    $region4: #{denoise_forward_test.1} parent=1 // loop_header_branch
      %33 = sbr.rel (%p31) target = $region8
    $region5: #{denoise_forward_test.1} parent=1 // loop_body
      %s35 = ssub.s32 %s30, 1
      %s36 = ssub.s32 %s30, 2
      %s37 = sadd.s32 %s30, 1
      %s38 = ssub.s32 %s30, %s37
      %p39 = scmp.eq.s32.totalorder %s38, 0
      %s41 = sadd.s32 %s40, 1
      %s42 = scalar_select %p39, %s40, %s41
      %p45 = pneg %p39
      %p46 = scmp.eq.s32.totalorder %s30, 1
      %p47 = por %p45, %p46
      %p48 = scmp.ne.s32.totalorder %s40, %s43
      %p49 = scmp.eq.s32.totalorder %s30, 0
      %p50 = por %p48, %p49
      %p51 = scmp.ne.s32.totalorder %s40, %s43
      %p52 = scmp.eq.s32.totalorder %s35, 1
      %p53 = por %p51, %p52
      %p54 = scmp.ne.s32.totalorder %s43, %s44
      %p55 = scmp.eq.s32.totalorder %s35, 0
      %p56 = por %p54, %p55
      %p57 = scmp.ne.s32.totalorder %s43, %s44
      %p58 = scmp.eq.s32.totalorder %s36, 1
      %p59 = por %p57, %p58
      %p61 = scmp.ne.s32.totalorder %s44, %s60
      %p62 = scmp.eq.s32.totalorder %s36, 0
      %p63 = por %p61, %p62
      %s65 = sadd.s32 %s64, 1
      %p68 = scmp.eq.s32.totalorder %s30, 1
      %p69 = scmp.ne.s32.totalorder %s64, %s66
      %p70 = scmp.eq.s32.totalorder %s30, 0
      %p71 = por %p69, %p70
      %p72 = scmp.ne.s32.totalorder %s64, %s66
      %p73 = scmp.eq.s32.totalorder %s35, 1
      %p74 = por %p72, %p73
      %p75 = scmp.ne.s32.totalorder %s66, %s67
      %p76 = scmp.eq.s32.totalorder %s35, 0
      %p77 = por %p75, %p76
      %p78 = scmp.ne.s32.totalorder %s66, %s67
      %p79 = scmp.eq.s32.totalorder %s36, 1
      %p80 = por %p78, %p79
      %p82 = scmp.ne.s32.totalorder %s67, %s81
      %p83 = scmp.eq.s32.totalorder %s36, 0
      %p84 = por %p82, %p83
      %s86 = sadd.s32 %s85, 1
      %p89 = scmp.eq.s32.totalorder %s30, 1
      %p90 = scmp.ne.s32.totalorder %s85, %s87
      %p91 = scmp.eq.s32.totalorder %s30, 0
      %p92 = por %p90, %p91
      %p93 = scmp.ne.s32.totalorder %s85, %s87
      %p94 = scmp.eq.s32.totalorder %s35, 1
      %p95 = por %p93, %p94
      %p96 = scmp.ne.s32.totalorder %s87, %s88
      %p97 = scmp.eq.s32.totalorder %s35, 0
      %p98 = por %p96, %p97
      %p99 = scmp.ne.s32.totalorder %s87, %s88
      %p100 = scmp.eq.s32.totalorder %s36, 1
      %p101 = por %p99, %p100
      %p103 = scmp.ne.s32.totalorder %s88, %s102
      %p104 = scmp.eq.s32.totalorder %s36, 0
      %p105 = por %p103, %p104
      %s106 = ssub.s32 %s30, %s37
      %p107 = scmp.eq.s32.totalorder %s106, 0
      %s109 = sadd.s32 %s108, 1
      %s110 = scalar_select %p107, %s108, %s109
      %p113 = pneg %p107
      %p114 = scmp.eq.s32.totalorder %s30, 1
      %p115 = por %p113, %p114
      %p116 = scmp.ne.s32.totalorder %s108, %s111
      %p117 = scmp.eq.s32.totalorder %s30, 0
      %p118 = por %p116, %p117
      %p119 = scmp.ne.s32.totalorder %s108, %s111
      %p120 = scmp.eq.s32.totalorder %s35, 1
      %p121 = por %p119, %p120
      %p122 = scmp.ne.s32.totalorder %s111, %s112
      %p123 = scmp.eq.s32.totalorder %s35, 0
      %p124 = por %p122, %p123
      %p125 = scmp.ne.s32.totalorder %s111, %s112
      %p126 = scmp.eq.s32.totalorder %s36, 1
      %p127 = por %p125, %p126
      %p129 = scmp.ne.s32.totalorder %s112, %s128
      %p130 = scmp.eq.s32.totalorder %s36, 0
      %p131 = por %p129, %p130
      %p132 = scmp.le.s32.totalorder 1, %s30
      %p133 = scmp.lt.s32.totalorder %s30, 3
      %p134 = pnand %p132, %p133
      %p135 = pneg %p134
      // Predicated region
      $region9: #{denoise_forward_test.1} parent=5 // pred_check
        _
      $region10: #{denoise_forward_test.1} parent=5 // pred_check_branch
        %137 = sbr.rel (%p134) target = $region12
      $region11: #{denoise_forward_test.1} parent=5 // pred_region
        %s138 = ssub.s32 %s30, 1
        // Predicated region
        $region13: #{denoise_forward_test.1} parent=11 // pred_check
          %p139 = pneg %p77
        $region14: #{denoise_forward_test.1} parent=11 // pred_check_branch
          %141 = sbr.rel (%p139) target = $region16
        $region15: #{denoise_forward_test.1} parent=11 // pred_region
          _
        $region16: #{denoise_forward_test.1} parent=11 // pred_fallthru
          _
        // Predicated region
        $region17: #{denoise_forward_test.1} parent=11 // pred_check
          %p142 = pneg %p98
        $region18: #{denoise_forward_test.1} parent=11 // pred_check_branch
          %144 = sbr.rel (%p142) target = $region20
        $region19: #{denoise_forward_test.1} parent=11 // pred_region
          _
        $region20: #{denoise_forward_test.1} parent=11 // pred_fallthru
          _
      $region12: #{denoise_forward_test.1} parent=5 // pred_fallthru
        _
      %p145 = scmp.lt.s32.totalorder %s30, 2
      // Predicated region
      $region21: #{denoise_forward_test.1} parent=5 // pred_check
        %p146 = pneg %p145
      $region22: #{denoise_forward_test.1} parent=5 // pred_check_branch
        %148 = sbr.rel (%p146) target = $region24
      $region23: #{denoise_forward_test.1} parent=5 // pred_region
        // Predicated region
        $region25: #{denoise_forward_test.1} parent=23 // pred_check
          %p149 = pneg %p50
        $region26: #{denoise_forward_test.1} parent=23 // pred_check_branch
          %151 = sbr.rel (%p149) target = $region28
        $region27: #{denoise_forward_test.1} parent=23 // pred_region
          %p152 = scmp.lt.s32.totalorder %s30, 1
          %s153 = scalar_select %p152, %s30, 1
          %s154 = smul.addr %s153, 2
          %s155 = smul.addr %s154, 8
          %s156 = scalar_lea.vmem %s3, %s155
        $region28: #{denoise_forward_test.1} parent=23 // pred_fallthru
          _
      $region24: #{denoise_forward_test.1} parent=5 // pred_fallthru
        _
      %p157 = scmp.le.s32.totalorder 1, %s30
      %p158 = scmp.lt.s32.totalorder %s30, 3
      %p159 = pnand %p157, %p158
      %p160 = pneg %p159
      // Predicated region
      $region29: #{denoise_forward_test.1} parent=5 // pred_check
        _
      $region30: #{denoise_forward_test.1} parent=5 // pred_check_branch
        %162 = sbr.rel (%p159) target = $region32
      $region31: #{denoise_forward_test.1} parent=5 // pred_region
        %s163 = ssub.s32 %s30, 1
        %p164 = scmp.lt.s32.totalorder %s35, 1
        %s165 = scalar_select %p164, %s35, 1
        %s166 = smul.addr %s165, 2
        %s167 = smul.addr %s166, 8
        %s168 = scalar_lea.vmem %s3, %s167
        %p169 = pneg %p56
        %p170 = pneg %p53
        %p171 = pneg %p77
        %p172 = pneg %p74
        %p173 = pneg %p98
        %p174 = pneg %p95
        %p175 = pneg %p124
        %p176 = pneg %p121
        %s177 = sand.u32 %s111, 1
        %s178 = scalar_lea.sflag [#allocation12], %s177
        %s179 = sand.u32 %s111, 1
        %s180 = scalar_lea.vmem [#allocation11], %s179
        %p181 = scmp.lt.s32.totalorder %s35, 1
        %s182 = scalar_select %p181, %s35, 1
        %s183 = smul.addr %s182, 2
        %s184 = smul.addr %s183, 8
        %s185 = scalar_lea.vmem %s3, %s184
        %s186 = smul.u32 %s35, 8
        %s187 = smul.u32 %s186, 128
        %s188 = sld [smem:[#allocation7 + %s187]]
        %s189 = scalar_lea.vmem %s185, %s188
        %v190 = vld [vmem:[%s189] sm:$0x1]
        %s191 = sadd.s32 %s187, 1
        %s192 = sld [smem:[#allocation7 + %s191]]
        %s193 = scalar_lea.vmem %s185, %s192
        %v194 = vld [vmem:[%s193] sm:$0x1]
        %v195 = vmax.f32 %v190, %v194
        %s196 = sadd.s32 %s187, 2
        %s197 = sld [smem:[#allocation7 + %s196]]
        %s198 = scalar_lea.vmem %s185, %s197
        %v199 = vld [vmem:[%s198] sm:$0x1]
        %v200 = vmax.f32 %v195, %v199
        %vm201 = vcmask 516096
        %202 = vst.msk [vmem:[#allocation2] sm:$0x1] %vm201, %v200
        %s203 = sadd.s32 1, %s186
        %s204 = smul.u32 %s203, 128
        %s205 = sld [smem:[#allocation7 + %s204]]
        %s206 = scalar_lea.vmem %s185, %s205
        %v207 = vld [vmem:[%s206] sm:$0x1]
        %s208 = sadd.s32 %s204, 1
        %s209 = sld [smem:[#allocation7 + %s208]]
        %s210 = scalar_lea.vmem %s185, %s209
        %v211 = vld [vmem:[%s210] sm:$0x1]
        %v212 = vmax.f32 %v207, %v211
        %s213 = sadd.s32 %s204, 2
        %s214 = sld [smem:[#allocation7 + %s213]]
        %s215 = scalar_lea.vmem %s185, %s214
        %v216 = vld [vmem:[%s215] sm:$0x1]
        %v217 = vmax.f32 %v212, %v216
        %218 = vst.msk [vmem:[#allocation2 + $0x1] sm:$0x1] %vm201, %v217
        %s219 = sadd.s32 2, %s186
        %s220 = smul.u32 %s219, 128
        %s221 = sld [smem:[#allocation7 + %s220]]
        %s222 = scalar_lea.vmem %s185, %s221
        %v223 = vld [vmem:[%s222] sm:$0x1]
        %s224 = sadd.s32 %s220, 1
        %s225 = sld [smem:[#allocation7 + %s224]]
        %s226 = scalar_lea.vmem %s185, %s225
        %v227 = vld [vmem:[%s226] sm:$0x1]
        %v228 = vmax.f32 %v223, %v227
        %s229 = sadd.s32 %s220, 2
        %s230 = sld [smem:[#allocation7 + %s229]]
        %s231 = scalar_lea.vmem %s185, %s230
        %v232 = vld [vmem:[%s231] sm:$0x1]
        %v233 = vmax.f32 %v228, %v232
        %234 = vst.msk [vmem:[#allocation2 + $0x2] sm:$0x1] %vm201, %v233
        %s235 = sadd.s32 3, %s186
        %s236 = smul.u32 %s235, 128
        %s237 = sld [smem:[#allocation7 + %s236]]
        %s238 = scalar_lea.vmem %s185, %s237
        %v239 = vld [vmem:[%s238] sm:$0x1]
        %s240 = sadd.s32 %s236, 1
        %s241 = sld [smem:[#allocation7 + %s240]]
        %s242 = scalar_lea.vmem %s185, %s241
        %v243 = vld [vmem:[%s242] sm:$0x1]
        %v244 = vmax.f32 %v239, %v243
        %s245 = sadd.s32 %s236, 2
        %s246 = sld [smem:[#allocation7 + %s245]]
        %s247 = scalar_lea.vmem %s185, %s246
        %v248 = vld [vmem:[%s247] sm:$0x1]
        %v249 = vmax.f32 %v244, %v248
        %250 = vst.msk [vmem:[#allocation2 + $0x3] sm:$0x1] %vm201, %v249
        %s251 = sadd.s32 4, %s186
        %s252 = smul.u32 %s251, 128
        %s253 = sld [smem:[#allocation7 + %s252]]
        %s254 = scalar_lea.vmem %s185, %s253
        %v255 = vld [vmem:[%s254] sm:$0x1]
        %s256 = sadd.s32 %s252, 1
        %s257 = sld [smem:[#allocation7 + %s256]]
        %s258 = scalar_lea.vmem %s185, %s257
        %v259 = vld [vmem:[%s258] sm:$0x1]
        %v260 = vmax.f32 %v255, %v259
        %s261 = sadd.s32 %s252, 2
        %s262 = sld [smem:[#allocation7 + %s261]]
        %s263 = scalar_lea.vmem %s185, %s262
        %v264 = vld [vmem:[%s263] sm:$0x1]
        %v265 = vmax.f32 %v260, %v264
        %266 = vst.msk [vmem:[#allocation2 + $0x4] sm:$0x1] %vm201, %v265
        %s267 = sadd.s32 5, %s186
        %s268 = smul.u32 %s267, 128
        %s269 = sld [smem:[#allocation7 + %s268]]
        %s270 = scalar_lea.vmem %s185, %s269
        %v271 = vld [vmem:[%s270] sm:$0x1]
        %s272 = sadd.s32 %s268, 1
        %s273 = sld [smem:[#allocation7 + %s272]]
        %s274 = scalar_lea.vmem %s185, %s273
        %v275 = vld [vmem:[%s274] sm:$0x1]
        %v276 = vmax.f32 %v271, %v275
        %s277 = sadd.s32 %s268, 2
        %s278 = sld [smem:[#allocation7 + %s277]]
        %s279 = scalar_lea.vmem %s185, %s278
        %v280 = vld [vmem:[%s279] sm:$0x1]
        %v281 = vmax.f32 %v276, %v280
        %282 = vst.msk [vmem:[#allocation2 + $0x5] sm:$0x1] %vm201, %v281
        %vm283 = vcmask 517120
        %284 = vst.msk [vmem:[#allocation2 + $0x6] sm:$0x3] %vm283, 0.0
        %v285 = vld [vmem:[#allocation2] sm:$0xff]
        %v286 = vld [vmem:[%s4] sm:$0xff]
        %v287 = vld [vmem:[%s4 + $0x8] sm:$0xff]
        %v288 = vld [vmem:[%s4 + $0x10] sm:$0xff]
        %v289 = vld [vmem:[%s4 + $0x18] sm:$0xff]
        %v290 = vld [vmem:[%s4 + $0x20] sm:$0xff]
        %v291 = vld [vmem:[%s4 + $0x28] sm:$0xff]
        %v292 = vld [vmem:[%s4 + $0x30] sm:$0xff]
        %v293 = vld [vmem:[%s4 + $0x38] sm:$0xff]
        %vm294 = vcmask 523264
        %v296 = vsel %vm294, %v285, 0
        %298 = vmatprep.subr.mxu0 0.0
        %299 = vmatpush1.msra.mxu0 %v286
        %300 = vmatprep.subr.mxu0 0.0
        %301 = vmatpush1.msra.mxu0 %v287
        %302 = vmatprep.subr.mxu0 0.0
        %303 = vmatpush1.msra.mxu0 %v288
        %304 = vmatprep.subr.mxu0 0.0
        %305 = vmatpush1.msra.mxu0 %v289
        %306 = vmatprep.subr.mxu0 0.0
        %307 = vmatpush1.msra.mxu0 %v290
        %308 = vmatprep.subr.mxu0 0.0
        %309 = vmatpush1.msra.mxu0 %v291
        %310 = vmatprep.subr.mxu0 0.0
        %311 = vmatpush1.msra.mxu0 %v292
        %312 = vmatprep.subr.mxu0 0.0
        %313 = vmatpush1.msra.mxu0 %v293
        %314 = vmatprep.subr.mxu0 0.0
        %315 = vmatpush1.msra.mxu0 0.0
        %316 = vmatprep.subr.mxu0 0.0
        %317 = vmatpush1.msra.mxu0 0.0
        %318 = vmatprep.subr.mxu0 0.0
        %319 = vmatpush1.msra.mxu0 0.0
        %320 = vmatprep.subr.mxu0 0.0
        %321 = vmatpush1.msra.mxu0 0.0
        %322 = vmatprep.subr.mxu0 0.0
        %323 = vmatpush1.msra.mxu0 0.0
        %324 = vmatprep.subr.mxu0 0.0
        %325 = vmatpush1.msra.mxu0 0.0
        %326 = vmatprep.subr.mxu0 0.0
        %327 = vmatpush1.msra.mxu0 0.0
        %328 = vmatprep.subr.mxu0 0.0
        %329 = vmatpush1.msra.mxu0 0.0
        %330 = vmatprep.subr.mxu0 0.0
        %331 = vmatpush1.msra.mxu0 0.0
        %332 = vmatprep.subr.mxu0 0.0
        %333 = vmatpush1.msra.mxu0 0.0
        %334 = vmatprep.subr.mxu0 0.0
        %335 = vmatpush1.msra.mxu0 0.0
        %336 = vmatprep.subr.mxu0 0.0
        %337 = vmatpush1.msra.mxu0 0.0
        %338 = vmatprep.subr.mxu0 0.0
        %339 = vmatpush1.msra.mxu0 0.0
        %340 = vmatprep.subr.mxu0 0.0
        %341 = vmatpush1.msra.mxu0 0.0
        %342 = vmatprep.subr.mxu0 0.0
        %343 = vmatpush1.msra.mxu0 0.0
        %344 = vmatprep.subr.mxu0 0.0
        %345 = vmatpush1.msra.mxu0 0.0
        %346 = vmatprep.subr.mxu0 0.0
        %347 = vmatpush1.msra.mxu0 0.0
        %348 = vmatprep.subr.mxu0 0.0
        %349 = vmatpush1.msra.mxu0 0.0
        %350 = vmatprep.subr.mxu0 0.0
        %351 = vmatpush1.msra.mxu0 0.0
        %352 = vmatprep.subr.mxu0 0.0
        %353 = vmatpush1.msra.mxu0 0.0
        %354 = vmatprep.subr.mxu0 0.0
        %355 = vmatpush1.msra.mxu0 0.0
        %356 = vmatprep.subr.mxu0 0.0
        %357 = vmatpush1.msra.mxu0 0.0
        %358 = vmatprep.subr.mxu0 0.0
        %359 = vmatpush1.msra.mxu0 0.0
        %360 = vmatprep.subr.mxu0 0.0
        %361 = vmatpush1.msra.mxu0 0.0
        %362 = vmatprep.mubr.f32.mxu0 0.0
        %363 = vmatmul.mubr.f32.gmra.mrb[0].mxu0 %v296
        %v364 = vpop.f32.mrb[0].mxu0
        %v365 = vadd.f32 0.0, %v364
        %v366 = vpop.f32.mrb[0].mxu0
        %367 = vdwg.mxu0
        %368 = vst.msk [vmem:[#allocation3] sm:$0xff] %vm294, %v365
        %s369 = smul.u32 %s35, 128
        %s370 = sld [smem:[#allocation8 + %s369]]
        %s371 = scalar_lea.vmem [#allocation3], %s370
        %v372 = vld [vmem:[%s371] sm:$0x1]
        %373 = vst.msk [vmem:[#allocation4] sm:$0x1] %vm201, %v372
        %s374 = sld [smem:[#allocation9 + %s369]]
        %s375 = scalar_lea.vmem [#allocation2], %s374
        %v376 = vld [vmem:[%s375] sm:$0x1]
        %377 = vst.msk [vmem:[#allocation5] sm:$0x1] %vm201, %v376
        %s378 = sadd.s32 %s369, 1
        %s379 = sld [smem:[#allocation8 + %s378]]
        %s380 = scalar_lea.vmem [#allocation3], %s379
        %v381 = vld [vmem:[%s380] sm:$0x1]
        %382 = vst.msk [vmem:[#allocation4 + $0x1] sm:$0x1] %vm201, %v381
        %s383 = sld [smem:[#allocation9 + %s378]]
        %s384 = scalar_lea.vmem [#allocation2], %s383
        %v385 = vld [vmem:[%s384] sm:$0x1]
        %386 = vst.msk [vmem:[#allocation5 + $0x1] sm:$0x1] %vm201, %v385
        %s387 = sadd.s32 %s369, 2
        %s388 = sld [smem:[#allocation8 + %s387]]
        %s389 = scalar_lea.vmem [#allocation3], %s388
        %v390 = vld [vmem:[%s389] sm:$0x1]
        %391 = vst.msk [vmem:[#allocation4 + $0x2] sm:$0x1] %vm201, %v390
        %s392 = sld [smem:[#allocation9 + %s387]]
        %s393 = scalar_lea.vmem [#allocation2], %s392
        %v394 = vld [vmem:[%s393] sm:$0x1]
        %395 = vst.msk [vmem:[#allocation5 + $0x2] sm:$0x1] %vm201, %v394
        %s396 = sadd.s32 %s369, 3
        %s397 = sld [smem:[#allocation8 + %s396]]
        %s398 = scalar_lea.vmem [#allocation3], %s397
        %v399 = vld [vmem:[%s398] sm:$0x1]
        %400 = vst.msk [vmem:[#allocation4 + $0x3] sm:$0x1] %vm201, %v399
        %s401 = sld [smem:[#allocation9 + %s396]]
        %s402 = scalar_lea.vmem [#allocation2], %s401
        %v403 = vld [vmem:[%s402] sm:$0x1]
        %404 = vst.msk [vmem:[#allocation5 + $0x3] sm:$0x1] %vm201, %v403
        %s405 = sadd.s32 %s369, 4
        %s406 = sld [smem:[#allocation8 + %s405]]
        %s407 = scalar_lea.vmem [#allocation3], %s406
        %v408 = vld [vmem:[%s407] sm:$0x1]
        %409 = vst.msk [vmem:[#allocation4 + $0x4] sm:$0x1] %vm201, %v408
        %s410 = sld [smem:[#allocation9 + %s405]]
        %s411 = scalar_lea.vmem [#allocation2], %s410
        %v412 = vld [vmem:[%s411] sm:$0x1]
        %413 = vst.msk [vmem:[#allocation5 + $0x4] sm:$0x1] %vm201, %v412
        %s414 = sadd.s32 %s369, 5
        %s415 = sld [smem:[#allocation8 + %s414]]
        %s416 = scalar_lea.vmem [#allocation3], %s415
        %v417 = vld [vmem:[%s416] sm:$0x1]
        %418 = vst.msk [vmem:[#allocation4 + $0x5] sm:$0x1] %vm201, %v417
        %s419 = sld [smem:[#allocation9 + %s414]]
        %s420 = scalar_lea.vmem [#allocation2], %s419
        %v421 = vld [vmem:[%s420] sm:$0x1]
        %422 = vst.msk [vmem:[#allocation5 + $0x5] sm:$0x1] %vm201, %v421
        %s423 = sadd.s32 %s369, 6
        %s424 = sld [smem:[#allocation8 + %s423]]
        %s425 = scalar_lea.vmem [#allocation3], %s424
        %v426 = vld [vmem:[%s425] sm:$0x1]
        %427 = vst.msk [vmem:[#allocation4 + $0x6] sm:$0x1] %vm201, %v426
        %s428 = sld [smem:[#allocation9 + %s423]]
        %s429 = scalar_lea.vmem [#allocation2], %s428
        %v430 = vld [vmem:[%s429] sm:$0x1]
        %431 = vst.msk [vmem:[#allocation5 + $0x6] sm:$0x1] %vm201, %v430
        %s432 = sadd.s32 %s369, 7
        %s433 = sld [smem:[#allocation8 + %s432]]
        %s434 = scalar_lea.vmem [#allocation3], %s433
        %v435 = vld [vmem:[%s434] sm:$0x1]
        %436 = vst.msk [vmem:[#allocation4 + $0x7] sm:$0x1] %vm201, %v435
        %s437 = sld [smem:[#allocation9 + %s432]]
        %s438 = scalar_lea.vmem [#allocation2], %s437
        %v439 = vld [vmem:[%s438] sm:$0x1]
        %440 = vst.msk [vmem:[#allocation5 + $0x7] sm:$0x1] %vm201, %v439
        %v441 = vld [vmem:[#allocation4] sm:$0xff]
        %v442 = vld [vmem:[#allocation5] sm:$0xff]
        %v443 = vmul.f32 %v441, %v442
        %v444 = vsel %vm294, %v443, 0.0
        %445 = vadd.xlane.f32.xlu0 %v444
        %v446 = vpop.xlane.xlu0 %445
        %s447 = sld [smem:[#allocation10]]
        %v448 = vstv %s447
        %v449 = vadd.f32 %v446, %v448
        %v451 = vlaneseq
        %v452 = vand.u32 %v451, 127
        %v453 = vlaneseq
        %v454 = vshrl.u32 %v453, 7
        %v455 = vsub.s32 %v452, %v454
        %v456 = vrot.slane %v449, %v455
        %vm458 = vcmask 57344
        %459 = vst.msk [vmem:[%s180] sm:$0x1] %vm458, %v456
        %s460 = sand.u32 %s111, 1
        %s461 = scalar_lea.sflag [#allocation12], %s460
        %s462 = sand.u32 %s111, 1
        %s463 = scalar_lea.vmem [#allocation11], %s462
        // Predicated region
        $region33: #{denoise_forward_test.1} parent=31 // pred_check
          %p464 = pneg %p121
        $region34: #{denoise_forward_test.1} parent=31 // pred_check_branch
          %466 = sbr.rel (%p464) target = $region36
        $region35: #{denoise_forward_test.1} parent=31 // pred_region
          %s468 = ssub.s32 16, 16
          %469 = vsyncadd %s461, %s468
          %s470 = smul.addr %s35, 16
          %s471 = scalar_lea.hbm %s6, %s470
          %s473 = sshll.u32 %s463, 4
          %s474 = int_to_ptr.vmem [resolvable:$true] %s473
          %476 = dma.vmem_to_hbm [thread:$0]  %s474, 16, %s471, %s461
        $region36: #{denoise_forward_test.1} parent=31 // pred_fallthru
          _
      $region32: #{denoise_forward_test.1} parent=5 // pred_fallthru
        _
      %p477 = scmp.le.s32.totalorder 2, %s30
      // Predicated region
      $region37: #{denoise_forward_test.1} parent=5 // pred_check
        %p478 = pneg %p477
      $region38: #{denoise_forward_test.1} parent=5 // pred_check_branch
        %480 = sbr.rel (%p478) target = $region40
      $region39: #{denoise_forward_test.1} parent=5 // pred_region
        %s481 = ssub.s32 %s30, 2
        // Predicated region
        $region41: #{denoise_forward_test.1} parent=39 // pred_check
          %p482 = pneg %p127
        $region42: #{denoise_forward_test.1} parent=39 // pred_check_branch
          %484 = sbr.rel (%p482) target = $region44
        $region43: #{denoise_forward_test.1} parent=39 // pred_region
          %s485 = sand.u32 %s112, 1
          %s486 = scalar_lea.sflag [#allocation12], %s485
          %s487 = sand.u32 %s112, 1
          %s488 = scalar_lea.vmem [#allocation11], %s487
          %489 = dma.done %s486, 16
        $region44: #{denoise_forward_test.1} parent=39 // pred_fallthru
          _
      $region40: #{denoise_forward_test.1} parent=5 // pred_fallthru
        _
    $region6: #{denoise_forward_test.1} parent=1 // loop_footer
      %s34 = sadd.s32 1, %s30
    $region7: #{denoise_forward_test.1} parent=1 // loop_footer_branch
      %29 = sbr.rel target = $region3
    $region8: #{denoise_forward_test.1} parent=1 // loop_exit
      _
    %490 = vsyncpa [#allocation12], 1
    %s491 = scalar_lea.sflag [#allocation12], 1
    %492 = vsyncpa %s491, 1

</llo_original>
